<compile_context>
chip_gen: v5e
topology: v5e:2x2
jax: 0.10.0
libtpu: 0.0.40
codegen_flags: <defaults>
</compile_context>

<pallas_src>
import functools

import jax
import jax.numpy as jnp
from jax import lax
from jax.experimental import pallas as pl
from jax.experimental.pallas import tpu as pltpu


def _round_up(x, m):
    return (x + m - 1) // m * m


def _assoc3d_kernel(f1_ref, f2_ref, w1_ref, b1_ref, w2_ref, b2_ref,
                    w3_ref, b3_ref, aff_ref, *, use_bf16):
    """Fused IDPredictor MLP + cosine-affinity kernel for one view-pair."""
    mxu_dtype = jnp.bfloat16 if use_bf16 else jnp.float32

    def mlp(x):
        # bf16 MXU feeding, f32 accumulation; bias add / ReLU stay f32.
        h = jnp.dot(x.astype(mxu_dtype), w1_ref[...],
                    preferred_element_type=jnp.float32) + b1_ref[...]
        h = jnp.maximum(h, 0.0)
        h = jnp.dot(h.astype(mxu_dtype), w2_ref[...],
                    preferred_element_type=jnp.float32) + b2_ref[...]
        h = jnp.maximum(h, 0.0)
        return jnp.dot(h.astype(mxu_dtype), w3_ref[...],
                       preferred_element_type=jnp.float32) + b3_ref[...]

    e1 = mlp(f1_ref[...])          # (N1p, 128)  (cols >= 64 are exactly zero)
    e2 = mlp(f2_ref[...])          # (N2p, 128)

    # affinity = sigmoid(5 * cosine_similarity(e1_i, e2_j))
    dn = (((1,), (1,)), ((), ()))  # contract last axes -> no e2.T relayout
    dots = lax.dot_general(e1, e2, dn, preferred_element_type=jnp.float32)

    ss1 = jnp.sum(e1 * e1, axis=-1, keepdims=True)                  # (N1p, 1)
    # Squared norms of e2 laid out along lanes directly (avoids a
    # sublane->lane relayout of a (N2p, 1) column vector).
    ones_row = jnp.ones((1, e2.shape[-1]), jnp.float32)
    ss2 = lax.dot_general(ones_row, e2 * e2, dn,
                          preferred_element_type=jnp.float32)       # (1, N2p)

    # rsqrt(max(ss1*ss2, eps^2)) == 1 / max(||e1||*||e2||, eps), eps = 1e-8.
    inv = lax.rsqrt(jnp.maximum(ss1 * ss2, 1e-16))
    aff_ref[...] = jax.nn.sigmoid(5.0 * dots * inv)


def associative3d_embedding_pairs(feat_view1, feat_view2, params, *,
                                  use_bf16=True):
    """Batched forward over P view-pairs.

    feat_view1: (P, N1, nz_feat), feat_view2: (P, N2, nz_feat)
    returns affinity (P, N1, N2) = sigmoid(5 * cos(emb1_i, emb2_j)).
    """
    p, n1, nz = feat_view1.shape
    p2, n2, nz2 = feat_view2.shape
    assert p == p2 and nz == nz2

    w1, b1, w2, b2, w3, b3 = params

    # Pad rows to sublane multiples; affinity columns padded lane-dense (128).
    n1p = _round_up(max(n1, 8), 8)
    n2p = _round_up(max(n2, 128), 128)
    f1 = jnp.pad(feat_view1, ((0, 0), (0, n1p - n1), (0, 0)))
    f2 = jnp.pad(feat_view2, ((0, 0), (0, n2p - n2), (0, 0)))

    # Zero-pad last layer to 128 output lanes (doesn't change dots / norms).
    d3 = w3.shape[1]
    d3p = _round_up(d3, 128)
    w3 = jnp.pad(w3, ((0, 0), (0, d3p - d3)))
    b3 = jnp.pad(b3, (0, d3p - d3))

    # bf16 weights halve the (one-time, resident) weight DMA and feed the MXU
    # natively on v6e/v7x; biases stay f32 (added post-accumulation).
    w_dtype = jnp.bfloat16 if use_bf16 else jnp.float32
    w1, w2, w3 = (w.astype(w_dtype) for w in (w1, w2, w3))
    b1, b2, b3 = (b.reshape(1, -1).astype(jnp.float32) for b in (b1, b2, b3))

    def resident(arr):  # same block every grid step -> stays VMEM-resident
        return pl.BlockSpec(arr.shape, lambda i: (0, 0))

    kernel = functools.partial(_assoc3d_kernel, use_bf16=use_bf16)
    out = pl.pallas_call(
        kernel,
        out_shape=jax.ShapeDtypeStruct((p, n1p, n2p), jnp.float32),
        grid=(p,),
        in_specs=[
            pl.BlockSpec((None, n1p, nz), lambda i: (i, 0, 0)),
            pl.BlockSpec((None, n2p, nz), lambda i: (i, 0, 0)),
            resident(w1), resident(b1),
            resident(w2), resident(b2),
            resident(w3), resident(b3),
        ],
        out_specs=pl.BlockSpec((None, n1p, n2p), lambda i: (i, 0, 0)),
        compiler_params=pltpu.CompilerParams(
            dimension_semantics=("parallel",)),
    )(f1, f2, w1, b1, w2, b2, w3, b3)

    return out[:, :n1, :n2]


def associative3d_embedding(feat_view1, feat_view2, params, *, use_bf16=True):
    """Single view-pair forward, matching the PyTorch module's forward."""
    return associative3d_embedding_pairs(
        feat_view1[None], feat_view2[None], params, use_bf16=use_bf16)[0]


def init_params(key, nz_feat):
    """Deterministic synthetic IDPredictor parameters (shapes from __init__)."""
    dims = [(nz_feat, 256), (256, 128), (128, 64)]
    params = []
    for i, (din, dout) in enumerate(dims):
        kw, kb = jax.random.split(jax.random.fold_in(key, i))
        bound = 1.0 / jnp.sqrt(din)
        w = jax.random.uniform(kw, (din, dout), jnp.float32, -bound, bound)
        b = jax.random.uniform(kb, (dout,), jnp.float32, -bound, bound)
        params += [w, b]
    return tuple(params)


def reference(feat_view1, feat_view2, params, *, use_bf16=False):
    """Pure-JAX reference mirroring the PyTorch forward (batched over pairs)."""
    w1, b1, w2, b2, w3, b3 = params
    cast = (lambda x: x.astype(jnp.bfloat16)) if use_bf16 else (lambda x: x)

    def mlp(x):
        h = jax.nn.relu(jnp.dot(cast(x), cast(w1),
                                preferred_element_type=jnp.float32) + b1)
        h = jax.nn.relu(jnp.dot(cast(h), cast(w2),
                                preferred_element_type=jnp.float32) + b2)
        return jnp.dot(cast(h), cast(w3),
                       preferred_element_type=jnp.float32) + b3

    e1, e2 = mlp(feat_view1), mlp(feat_view2)        # (P, N, 64)
    dots = jnp.einsum('pik,pjk->pij', e1, e2)
    denom = jnp.maximum(
        jnp.linalg.norm(e1, axis=-1)[:, :, None]
        * jnp.linalg.norm(e2, axis=-1)[:, None, :], 1e-8)
    return jax.nn.sigmoid(5.0 * dots / denom)


if __name__ == "__main__":
    key = jax.random.PRNGKey(0)
    nz_feat = 32          # obj_features_len
    n_pairs = 4           # batch of view-pairs processed in one gridded call
    n_obj1, n_obj2 = 10, 7

    k_feat1, k_feat2, k_params = jax.random.split(key, 3)
    feat_view1 = jax.random.normal(k_feat1, (n_pairs, n_obj1, nz_feat), jnp.float32)
    feat_view2 = jax.random.normal(k_feat2, (n_pairs, n_obj2, nz_feat), jnp.float32)
    params = init_params(k_params, nz_feat)

    # Batched, bf16-fed path (the optimized configuration).
    affinity = associative3d_embedding_pairs(feat_view1, feat_view2, params,
                                             use_bf16=True)
    affinity = jax.block_until_ready(affinity)
    assert affinity.shape == (n_pairs, n_obj1, n_obj2)

    ref_bf16 = reference(feat_view1, feat_view2, params, use_bf16=True)
    ref_f32 = reference(feat_view1, feat_view2, params, use_bf16=False)
    assert jnp.allclose(affinity, ref_bf16, atol=2e-2, rtol=0.0), \
        "mismatch vs bf16-matched reference"
    assert jnp.allclose(affinity, ref_f32, atol=5e-2, rtol=0.0), \
        "mismatch vs fp32 reference"

    # Single-pair fp32 path (exactly the PyTorch module semantics).
    aff_single = associative3d_embedding(feat_view1[0], feat_view2[0], params,
                                         use_bf16=False)
    aff_single = jax.block_until_ready(aff_single)
    ref_single = reference(feat_view1[:1], feat_view2[:1], params,
                           use_bf16=False)[0]
    assert aff_single.shape == (n_obj1, n_obj2)
    assert jnp.allclose(aff_single, ref_single, atol=1e-4, rtol=1e-4), \
        "single-pair fp32 mismatch vs reference"

    print("KERNEL_OK")
</pallas_src>

<mosaic_0001>
module attributes {stable_mosaic.version = 11 : i64} {
  func.func @_assoc3d_kernel(%arg0: i32, %arg1: memref<1x16x32xf32, #tpu.memory_space<vmem>>, %arg2: memref<1x128x32xf32, #tpu.memory_space<vmem>>, %arg3: memref<32x256xbf16, #tpu.memory_space<vmem>>, %arg4: memref<1x256xf32, #tpu.memory_space<vmem>>, %arg5: memref<256x128xbf16, #tpu.memory_space<vmem>>, %arg6: memref<1x128xf32, #tpu.memory_space<vmem>>, %arg7: memref<128x128xbf16, #tpu.memory_space<vmem>>, %arg8: memref<1x128xf32, #tpu.memory_space<vmem>>, %arg9: memref<1x16x128xf32, #tpu.memory_space<vmem>>) attributes {dimension_semantics = [#tpu.dimension_semantics<parallel>], iteration_bounds = array<i64: 4>, scalar_prefetch = 0 : i64, scratch_operands = 0 : i64, tpu.core_type = #tpu.core_type<tc>, window_params = [{transform_indices = @transform_0, window_bounds = array<i64: 1, 16, 32>}, {transform_indices = @transform_1, window_bounds = array<i64: 1, 128, 32>}, {pipeline_mode = #tpu.pipeline_mode<synchronous>, transform_indices = @transform_2, window_bounds = array<i64: 32, 256>}, {pipeline_mode = #tpu.pipeline_mode<synchronous>, transform_indices = @transform_3, window_bounds = array<i64: 1, 256>}, {pipeline_mode = #tpu.pipeline_mode<synchronous>, transform_indices = @transform_4, window_bounds = array<i64: 256, 128>}, {pipeline_mode = #tpu.pipeline_mode<synchronous>, transform_indices = @transform_5, window_bounds = array<i64: 1, 128>}, {pipeline_mode = #tpu.pipeline_mode<synchronous>, transform_indices = @transform_6, window_bounds = array<i64: 128, 128>}, {pipeline_mode = #tpu.pipeline_mode<synchronous>, transform_indices = @transform_7, window_bounds = array<i64: 1, 128>}, {transform_indices = @transform_8, window_bounds = array<i64: 1, 16, 128>}]} {
    %c0 = arith.constant 0 : index
    %c0_0 = arith.constant 0 : index
    %c0_1 = arith.constant 0 : index
    %0 = vector.load %arg1[%c0, %c0_0, %c0_1] : memref<1x16x32xf32, #tpu.memory_space<vmem>>, vector<1x16x32xf32>
    %1 = vector.shape_cast %0 : vector<1x16x32xf32> to vector<16x32xf32>
    %2 = arith.truncf %1 : vector<16x32xf32> to vector<16x32xbf16>
    %c0_2 = arith.constant 0 : index
    %c0_3 = arith.constant 0 : index
    %3 = vector.load %arg3[%c0_2, %c0_3] : memref<32x256xbf16, #tpu.memory_space<vmem>>, vector<32x256xbf16>
    %cst = arith.constant dense<0.000000e+00> : vector<16x256xf32>
    %4 = tpu.matmul %2, %3, %cst {dimension_numbers = #tpu.dot_dimension_numbers<[1], [0], [0], [1], [0, 0, 1, 1], [], []>} : vector<16x32xbf16>, vector<32x256xbf16>, vector<16x256xf32> -> vector<16x256xf32>
    %c0_4 = arith.constant 0 : index
    %c0_5 = arith.constant 0 : index
    %5 = vector.load %arg4[%c0_4, %c0_5] : memref<1x256xf32, #tpu.memory_space<vmem>>, vector<1x256xf32>
    %6 = vector.broadcast %5 : vector<1x256xf32> to vector<16x256xf32>
    %7 = arith.addf %4, %6 : vector<16x256xf32>
    %cst_6 = arith.constant 0.000000e+00 : f32
    %8 = vector.broadcast %cst_6 : f32 to vector<16x256xf32>
    %9 = arith.maximumf %7, %8 : vector<16x256xf32>
    %10 = arith.truncf %9 : vector<16x256xf32> to vector<16x256xbf16>
    %c0_7 = arith.constant 0 : index
    %c0_8 = arith.constant 0 : index
    %11 = vector.load %arg5[%c0_7, %c0_8] : memref<256x128xbf16, #tpu.memory_space<vmem>>, vector<256x128xbf16>
    %cst_9 = arith.constant dense<0.000000e+00> : vector<16x128xf32>
    %12 = tpu.matmul %10, %11, %cst_9 {dimension_numbers = #tpu.dot_dimension_numbers<[1], [0], [0], [1], [0, 0, 1, 1], [], []>} : vector<16x256xbf16>, vector<256x128xbf16>, vector<16x128xf32> -> vector<16x128xf32>
    %c0_10 = arith.constant 0 : index
    %c0_11 = arith.constant 0 : index
    %13 = vector.load %arg6[%c0_10, %c0_11] : memref<1x128xf32, #tpu.memory_space<vmem>>, vector<1x128xf32>
    %14 = vector.broadcast %13 : vector<1x128xf32> to vector<16x128xf32>
    %15 = arith.addf %12, %14 : vector<16x128xf32>
    %cst_12 = arith.constant 0.000000e+00 : f32
    %16 = vector.broadcast %cst_12 : f32 to vector<16x128xf32>
    %17 = arith.maximumf %15, %16 : vector<16x128xf32>
    %18 = arith.truncf %17 : vector<16x128xf32> to vector<16x128xbf16>
    %c0_13 = arith.constant 0 : index
    %c0_14 = arith.constant 0 : index
    %19 = vector.load %arg7[%c0_13, %c0_14] : memref<128x128xbf16, #tpu.memory_space<vmem>>, vector<128x128xbf16>
    %cst_15 = arith.constant dense<0.000000e+00> : vector<16x128xf32>
    %20 = tpu.matmul %18, %19, %cst_15 {dimension_numbers = #tpu.dot_dimension_numbers<[1], [0], [0], [1], [0, 0, 1, 1], [], []>} : vector<16x128xbf16>, vector<128x128xbf16>, vector<16x128xf32> -> vector<16x128xf32>
    %c0_16 = arith.constant 0 : index
    %c0_17 = arith.constant 0 : index
    %21 = vector.load %arg8[%c0_16, %c0_17] : memref<1x128xf32, #tpu.memory_space<vmem>>, vector<1x128xf32>
    %22 = vector.broadcast %21 : vector<1x128xf32> to vector<16x128xf32>
    %23 = arith.addf %20, %22 : vector<16x128xf32>
    %c0_18 = arith.constant 0 : index
    %c0_19 = arith.constant 0 : index
    %c0_20 = arith.constant 0 : index
    %24 = vector.load %arg2[%c0_18, %c0_19, %c0_20] : memref<1x128x32xf32, #tpu.memory_space<vmem>>, vector<1x128x32xf32>
    %25 = vector.shape_cast %24 : vector<1x128x32xf32> to vector<128x32xf32>
    %26 = arith.truncf %25 : vector<128x32xf32> to vector<128x32xbf16>
    %c0_21 = arith.constant 0 : index
    %c0_22 = arith.constant 0 : index
    %27 = vector.load %arg3[%c0_21, %c0_22] : memref<32x256xbf16, #tpu.memory_space<vmem>>, vector<32x256xbf16>
    %cst_23 = arith.constant dense<0.000000e+00> : vector<128x256xf32>
    %28 = tpu.matmul %26, %27, %cst_23 {dimension_numbers = #tpu.dot_dimension_numbers<[1], [0], [0], [1], [0, 0, 1, 1], [], []>} : vector<128x32xbf16>, vector<32x256xbf16>, vector<128x256xf32> -> vector<128x256xf32>
    %c0_24 = arith.constant 0 : index
    %c0_25 = arith.constant 0 : index
    %29 = vector.load %arg4[%c0_24, %c0_25] : memref<1x256xf32, #tpu.memory_space<vmem>>, vector<1x256xf32>
    %30 = vector.broadcast %29 : vector<1x256xf32> to vector<128x256xf32>
    %31 = arith.addf %28, %30 : vector<128x256xf32>
    %cst_26 = arith.constant 0.000000e+00 : f32
    %32 = vector.broadcast %cst_26 : f32 to vector<128x256xf32>
    %33 = arith.maximumf %31, %32 : vector<128x256xf32>
    %34 = arith.truncf %33 : vector<128x256xf32> to vector<128x256xbf16>
    %c0_27 = arith.constant 0 : index
    %c0_28 = arith.constant 0 : index
    %35 = vector.load %arg5[%c0_27, %c0_28] : memref<256x128xbf16, #tpu.memory_space<vmem>>, vector<256x128xbf16>
    %cst_29 = arith.constant dense<0.000000e+00> : vector<128x128xf32>
    %36 = tpu.matmul %34, %35, %cst_29 {dimension_numbers = #tpu.dot_dimension_numbers<[1], [0], [0], [1], [0, 0, 1, 1], [], []>} : vector<128x256xbf16>, vector<256x128xbf16>, vector<128x128xf32> -> vector<128x128xf32>
    %c0_30 = arith.constant 0 : index
    %c0_31 = arith.constant 0 : index
    %37 = vector.load %arg6[%c0_30, %c0_31] : memref<1x128xf32, #tpu.memory_space<vmem>>, vector<1x128xf32>
    %38 = vector.broadcast %37 : vector<1x128xf32> to vector<128x128xf32>
    %39 = arith.addf %36, %38 : vector<128x128xf32>
    %cst_32 = arith.constant 0.000000e+00 : f32
    %40 = vector.broadcast %cst_32 : f32 to vector<128x128xf32>
    %41 = arith.maximumf %39, %40 : vector<128x128xf32>
    %42 = arith.truncf %41 : vector<128x128xf32> to vector<128x128xbf16>
    %c0_33 = arith.constant 0 : index
    %c0_34 = arith.constant 0 : index
    %43 = vector.load %arg7[%c0_33, %c0_34] : memref<128x128xbf16, #tpu.memory_space<vmem>>, vector<128x128xbf16>
    %cst_35 = arith.constant dense<0.000000e+00> : vector<128x128xf32>
    %44 = tpu.matmul %42, %43, %cst_35 {dimension_numbers = #tpu.dot_dimension_numbers<[1], [0], [0], [1], [0, 0, 1, 1], [], []>} : vector<128x128xbf16>, vector<128x128xbf16>, vector<128x128xf32> -> vector<128x128xf32>
    %c0_36 = arith.constant 0 : index
    %c0_37 = arith.constant 0 : index
    %45 = vector.load %arg8[%c0_36, %c0_37] : memref<1x128xf32, #tpu.memory_space<vmem>>, vector<1x128xf32>
    %46 = vector.broadcast %45 : vector<1x128xf32> to vector<128x128xf32>
    %47 = arith.addf %44, %46 : vector<128x128xf32>
    %cst_38 = arith.constant dense<0.000000e+00> : vector<16x128xf32>
    %48 = tpu.matmul %23, %47, %cst_38 {dimension_numbers = #tpu.dot_dimension_numbers<[1], [1], [0], [0], [0, 0, 1, 0], [], []>} : vector<16x128xf32>, vector<128x128xf32>, vector<16x128xf32> -> vector<16x128xf32>
    %49 = arith.mulf %23, %23 : vector<16x128xf32>
    %cst_39 = arith.constant dense<0.000000e+00> : vector<16xf32>
    %50 = vector.multi_reduction <add>, %49, %cst_39 [1] : vector<16x128xf32> to vector<16xf32>
    %51 = vector.shape_cast %50 : vector<16xf32> to vector<16x1xf32>
    %cst_40 = arith.constant 1.000000e+00 : f32
    %52 = vector.broadcast %cst_40 : f32 to vector<1x128xf32>
    %53 = arith.mulf %47, %47 : vector<128x128xf32>
    %cst_41 = arith.constant dense<0.000000e+00> : vector<1x128xf32>
    %54 = tpu.matmul %52, %53, %cst_41 {dimension_numbers = #tpu.dot_dimension_numbers<[1], [1], [0], [0], [0, 0, 1, 0], [], []>} : vector<1x128xf32>, vector<128x128xf32>, vector<1x128xf32> -> vector<1x128xf32>
    %55 = vector.broadcast %51 : vector<16x1xf32> to vector<16x128xf32>
    %56 = vector.broadcast %54 : vector<1x128xf32> to vector<16x128xf32>
    %57 = arith.mulf %55, %56 : vector<16x128xf32>
    %cst_42 = arith.constant 1.000000e-16 : f32
    %58 = vector.broadcast %cst_42 : f32 to vector<16x128xf32>
    %59 = arith.maximumf %57, %58 : vector<16x128xf32>
    %60 = math.rsqrt %59 : vector<16x128xf32>
    %cst_43 = arith.constant 5.000000e+00 : f32
    %61 = vector.broadcast %cst_43 : f32 to vector<16x128xf32>
    %62 = arith.mulf %61, %48 : vector<16x128xf32>
    %63 = arith.mulf %62, %60 : vector<16x128xf32>
    %64 = arith.negf %63 : vector<16x128xf32>
    %65 = math.exp %64 : vector<16x128xf32>
    %cst_44 = arith.constant 1.000000e+00 : f32
    %66 = vector.broadcast %cst_44 : f32 to vector<16x128xf32>
    %67 = arith.addf %66, %65 : vector<16x128xf32>
    %68 = arith.divf %66, %67 : vector<16x128xf32>
    %c0_45 = arith.constant 0 : index
    %c0_46 = arith.constant 0 : index
    %c0_47 = arith.constant 0 : index
    %69 = vector.load %arg9[%c0_45, %c0_46, %c0_47] : memref<1x16x128xf32, #tpu.memory_space<vmem>>, vector<1x16x128xf32>
    %70 = vector.shape_cast %69 : vector<1x16x128xf32> to vector<16x128xf32>
    %71 = vector.shape_cast %68 : vector<16x128xf32> to vector<1x16x128xf32>
    tpu.vector_store %arg9[%c0_45, %c0_46, %c0_47], %71 {strides = array<i32>} : memref<1x16x128xf32, #tpu.memory_space<vmem>>, vector<1x16x128xf32>,
    return
  }
  func.func @transform_0(%arg0: i32) -> (i32, i32, i32) {
    %c0_i32 = arith.constant 0 : i32
    %c0_i32_0 = arith.constant 0 : i32
    %c0_i32_1 = arith.constant 0 : i32
    return %arg0, %c0_i32, %c0_i32_0 : i32, i32, i32
  }
  func.func @transform_1(%arg0: i32) -> (i32, i32, i32) {
    %c0_i32 = arith.constant 0 : i32
    %c0_i32_0 = arith.constant 0 : i32
    %c0_i32_1 = arith.constant 0 : i32
    return %arg0, %c0_i32, %c0_i32_0 : i32, i32, i32
  }
  func.func @transform_2(%arg0: i32) -> (i32, i32) {
    %c0_i32 = arith.constant 0 : i32
    %c0_i32_0 = arith.constant 0 : i32
    %c0_i32_1 = arith.constant 0 : i32
    return %c0_i32, %c0_i32_0 : i32, i32
  }
  func.func @transform_3(%arg0: i32) -> (i32, i32) {
    %c0_i32 = arith.constant 0 : i32
    %c0_i32_0 = arith.constant 0 : i32
    %c0_i32_1 = arith.constant 0 : i32
    return %c0_i32, %c0_i32_0 : i32, i32
  }
  func.func @transform_4(%arg0: i32) -> (i32, i32) {
    %c0_i32 = arith.constant 0 : i32
    %c0_i32_0 = arith.constant 0 : i32
    %c0_i32_1 = arith.constant 0 : i32
    return %c0_i32, %c0_i32_0 : i32, i32
  }
  func.func @transform_5(%arg0: i32) -> (i32, i32) {
    %c0_i32 = arith.constant 0 : i32
    %c0_i32_0 = arith.constant 0 : i32
    %c0_i32_1 = arith.constant 0 : i32
    return %c0_i32, %c0_i32_0 : i32, i32
  }
  func.func @transform_6(%arg0: i32) -> (i32, i32) {
    %c0_i32 = arith.constant 0 : i32
    %c0_i32_0 = arith.constant 0 : i32
    %c0_i32_1 = arith.constant 0 : i32
    return %c0_i32, %c0_i32_0 : i32, i32
  }
  func.func @transform_7(%arg0: i32) -> (i32, i32) {
    %c0_i32 = arith.constant 0 : i32
    %c0_i32_0 = arith.constant 0 : i32
    %c0_i32_1 = arith.constant 0 : i32
    return %c0_i32, %c0_i32_0 : i32, i32
  }
  func.func @transform_8(%arg0: i32) -> (i32, i32, i32) {
    %c0_i32 = arith.constant 0 : i32
    %c0_i32_0 = arith.constant 0 : i32
    %c0_i32_1 = arith.constant 0 : i32
    return %arg0, %c0_i32, %c0_i32_0 : i32, i32, i32
  }
}

</mosaic_0001>

<llo_original>
// kernel: tpu_custom_call.1
$region0: #{tpu_custom_call.1}
  #allocation0 [shape = 'u32[]', space=smem, size = 0x4, offset = 0x4, fixed_abs, tag = 'smem constant byte address 0x4 - core index']
  #allocation1 [shape = 'u32[72,128]{1,0:T(1,128)}', space=vmem, size = 0x9000, scoped, tag = 'internal scratch']
  %s0 = inlined_call_operand.vmem [shape: f32[4,16,32], index: 0, kind: input, shape index: {}]
  %s1 = inlined_call_operand.vmem [shape: f32[4,128,32], index: 1, kind: input, shape index: {}]
  %s2 = inlined_call_operand.vmem [shape: bf16[32,256], index: 2, kind: input, shape index: {}]
  %s3 = inlined_call_operand.vmem [shape: f32[1,256], index: 3, kind: input, shape index: {}]
  %s4 = inlined_call_operand.vmem [shape: bf16[256,128], index: 4, kind: input, shape index: {}]
  %s5 = inlined_call_operand.vmem [shape: f32[1,128], index: 5, kind: input, shape index: {}]
  %s6 = inlined_call_operand.vmem [shape: bf16[128,128], index: 6, kind: input, shape index: {}]
  %s7 = inlined_call_operand.vmem [shape: f32[1,128], index: 7, kind: input, shape index: {}]
  %s8 = inlined_call_operand.hbm [shape: f32[4,16,128], index: 8, kind: output, shape index: {}]
  %s9 = sld [smem:[#allocation0]]
  $region65: #{tpu_custom_call.1} parent=0
    _
  %s11 = ssub.s32 1, %s9
  %s12 = scalar_select 0, %s11, %s9
  $region1: #{tpu_custom_call.1} parent=0
    #allocation2 [shape = 'u8[16384]{0}', space=vmem, size = 0x4000, scoped, tag = 'output window, operand 0']
    #allocation3 [shape = 's32[2]{0}', space=sflag, size = 0x8, scoped, tag = 'scoped memory for tpu_custom_call.1']
    %13 = vsyncpa [#allocation3], 0
    %s14 = scalar_lea.sflag [#allocation3], 1
    %15 = vsyncpa %s14, 0
    loop: start=0, step=1, limit=6
    $region2: #{tpu_custom_call.1} parent=1 // loop_pre_header
      _
    $region3: #{tpu_custom_call.1} parent=1 // loop_header
      %s17 = sphi 0, %s21
      %p18 = scmp.ge.s32.totalorder %s17, 6
      %s27 = sphi 0, %s29
      %s30 = sphi 0, %s27
      %s31 = sphi 0, %s30
      %s47 = sphi 0, %s31
      %s53 = sphi 0, %s55
      %s56 = sphi 0, %s53
      %s57 = sphi 0, %s56
      %s73 = sphi 0, %s57
      %s77 = sphi 0, %s77
      %s79 = sphi 0, %s77
      %s80 = sphi 0, %s79
      %s94 = sphi 0, %s80
      %s98 = sphi 0, %s98
      %s100 = sphi 0, %s98
      %s101 = sphi 0, %s100
      %s115 = sphi 0, %s101
      %s119 = sphi 0, %s119
      %s121 = sphi 0, %s119
      %s122 = sphi 0, %s121
      %s136 = sphi 0, %s122
      %s140 = sphi 0, %s140
      %s142 = sphi 0, %s140
      %s143 = sphi 0, %s142
      %s157 = sphi 0, %s143
      %s161 = sphi 0, %s161
      %s163 = sphi 0, %s161
      %s164 = sphi 0, %s163
      %s178 = sphi 0, %s164
      %s182 = sphi 0, %s182
      %s184 = sphi 0, %s182
      %s185 = sphi 0, %s184
      %s199 = sphi 0, %s185
      %s205 = sphi 0, %s207
      %s208 = sphi 0, %s205
      %s209 = sphi 0, %s208
      %s225 = sphi 0, %s209
    $region4: #{tpu_custom_call.1} parent=1 // loop_header_branch
      %20 = sbr.rel (%p18) target = $region8
    $region5: #{tpu_custom_call.1} parent=1 // loop_body
      %s22 = ssub.s32 %s17, 1
      %s23 = ssub.s32 %s17, 2
      %s24 = sadd.s32 %s17, 1
      %s25 = ssub.s32 %s17, %s24
      %p26 = scmp.eq.s32.totalorder %s25, 0
      %s28 = sadd.s32 %s27, 1
      %s29 = scalar_select %p26, %s27, %s28
      %p32 = pneg %p26
      %p33 = scmp.eq.s32.totalorder %s17, 3
      %p34 = por %p32, %p33
      %p35 = scmp.ne.s32.totalorder %s27, %s30
      %p36 = scmp.eq.s32.totalorder %s17, 0
      %p37 = por %p35, %p36
      %p38 = scmp.ne.s32.totalorder %s27, %s30
      %p39 = scmp.eq.s32.totalorder %s22, 3
      %p40 = por %p38, %p39
      %p41 = scmp.ne.s32.totalorder %s30, %s31
      %p42 = scmp.eq.s32.totalorder %s22, 0
      %p43 = por %p41, %p42
      %p44 = scmp.ne.s32.totalorder %s30, %s31
      %p45 = scmp.eq.s32.totalorder %s23, 3
      %p46 = por %p44, %p45
      %p48 = scmp.ne.s32.totalorder %s31, %s47
      %p49 = scmp.eq.s32.totalorder %s23, 0
      %p50 = por %p48, %p49
      %s51 = ssub.s32 %s17, %s24
      %p52 = scmp.eq.s32.totalorder %s51, 0
      %s54 = sadd.s32 %s53, 1
      %s55 = scalar_select %p52, %s53, %s54
      %p58 = pneg %p52
      %p59 = scmp.eq.s32.totalorder %s17, 3
      %p60 = por %p58, %p59
      %p61 = scmp.ne.s32.totalorder %s53, %s56
      %p62 = scmp.eq.s32.totalorder %s17, 0
      %p63 = por %p61, %p62
      %p64 = scmp.ne.s32.totalorder %s53, %s56
      %p65 = scmp.eq.s32.totalorder %s22, 3
      %p66 = por %p64, %p65
      %p67 = scmp.ne.s32.totalorder %s56, %s57
      %p68 = scmp.eq.s32.totalorder %s22, 0
      %p69 = por %p67, %p68
      %p70 = scmp.ne.s32.totalorder %s56, %s57
      %p71 = scmp.eq.s32.totalorder %s23, 3
      %p72 = por %p70, %p71
      %p74 = scmp.ne.s32.totalorder %s57, %s73
      %p75 = scmp.eq.s32.totalorder %s23, 0
      %p76 = por %p74, %p75
      %s78 = sadd.s32 %s77, 1
      %p81 = scmp.eq.s32.totalorder %s17, 3
      %p82 = scmp.ne.s32.totalorder %s77, %s79
      %p83 = scmp.eq.s32.totalorder %s17, 0
      %p84 = por %p82, %p83
      %p85 = scmp.ne.s32.totalorder %s77, %s79
      %p86 = scmp.eq.s32.totalorder %s22, 3
      %p87 = por %p85, %p86
      %p88 = scmp.ne.s32.totalorder %s79, %s80
      %p89 = scmp.eq.s32.totalorder %s22, 0
      %p90 = por %p88, %p89
      %p91 = scmp.ne.s32.totalorder %s79, %s80
      %p92 = scmp.eq.s32.totalorder %s23, 3
      %p93 = por %p91, %p92
      %p95 = scmp.ne.s32.totalorder %s80, %s94
      %p96 = scmp.eq.s32.totalorder %s23, 0
      %p97 = por %p95, %p96
      %s99 = sadd.s32 %s98, 1
      %p102 = scmp.eq.s32.totalorder %s17, 3
      %p103 = scmp.ne.s32.totalorder %s98, %s100
      %p104 = scmp.eq.s32.totalorder %s17, 0
      %p105 = por %p103, %p104
      %p106 = scmp.ne.s32.totalorder %s98, %s100
      %p107 = scmp.eq.s32.totalorder %s22, 3
      %p108 = por %p106, %p107
      %p109 = scmp.ne.s32.totalorder %s100, %s101
      %p110 = scmp.eq.s32.totalorder %s22, 0
      %p111 = por %p109, %p110
      %p112 = scmp.ne.s32.totalorder %s100, %s101
      %p113 = scmp.eq.s32.totalorder %s23, 3
      %p114 = por %p112, %p113
      %p116 = scmp.ne.s32.totalorder %s101, %s115
      %p117 = scmp.eq.s32.totalorder %s23, 0
      %p118 = por %p116, %p117
      %s120 = sadd.s32 %s119, 1
      %p123 = scmp.eq.s32.totalorder %s17, 3
      %p124 = scmp.ne.s32.totalorder %s119, %s121
      %p125 = scmp.eq.s32.totalorder %s17, 0
      %p126 = por %p124, %p125
      %p127 = scmp.ne.s32.totalorder %s119, %s121
      %p128 = scmp.eq.s32.totalorder %s22, 3
      %p129 = por %p127, %p128
      %p130 = scmp.ne.s32.totalorder %s121, %s122
      %p131 = scmp.eq.s32.totalorder %s22, 0
      %p132 = por %p130, %p131
      %p133 = scmp.ne.s32.totalorder %s121, %s122
      %p134 = scmp.eq.s32.totalorder %s23, 3
      %p135 = por %p133, %p134
      %p137 = scmp.ne.s32.totalorder %s122, %s136
      %p138 = scmp.eq.s32.totalorder %s23, 0
      %p139 = por %p137, %p138
      %s141 = sadd.s32 %s140, 1
      %p144 = scmp.eq.s32.totalorder %s17, 3
      %p145 = scmp.ne.s32.totalorder %s140, %s142
      %p146 = scmp.eq.s32.totalorder %s17, 0
      %p147 = por %p145, %p146
      %p148 = scmp.ne.s32.totalorder %s140, %s142
      %p149 = scmp.eq.s32.totalorder %s22, 3
      %p150 = por %p148, %p149
      %p151 = scmp.ne.s32.totalorder %s142, %s143
      %p152 = scmp.eq.s32.totalorder %s22, 0
      %p153 = por %p151, %p152
      %p154 = scmp.ne.s32.totalorder %s142, %s143
      %p155 = scmp.eq.s32.totalorder %s23, 3
      %p156 = por %p154, %p155
      %p158 = scmp.ne.s32.totalorder %s143, %s157
      %p159 = scmp.eq.s32.totalorder %s23, 0
      %p160 = por %p158, %p159
      %s162 = sadd.s32 %s161, 1
      %p165 = scmp.eq.s32.totalorder %s17, 3
      %p166 = scmp.ne.s32.totalorder %s161, %s163
      %p167 = scmp.eq.s32.totalorder %s17, 0
      %p168 = por %p166, %p167
      %p169 = scmp.ne.s32.totalorder %s161, %s163
      %p170 = scmp.eq.s32.totalorder %s22, 3
      %p171 = por %p169, %p170
      %p172 = scmp.ne.s32.totalorder %s163, %s164
      %p173 = scmp.eq.s32.totalorder %s22, 0
      %p174 = por %p172, %p173
      %p175 = scmp.ne.s32.totalorder %s163, %s164
      %p176 = scmp.eq.s32.totalorder %s23, 3
      %p177 = por %p175, %p176
      %p179 = scmp.ne.s32.totalorder %s164, %s178
      %p180 = scmp.eq.s32.totalorder %s23, 0
      %p181 = por %p179, %p180
      %s183 = sadd.s32 %s182, 1
      %p186 = scmp.eq.s32.totalorder %s17, 3
      %p187 = scmp.ne.s32.totalorder %s182, %s184
      %p188 = scmp.eq.s32.totalorder %s17, 0
      %p189 = por %p187, %p188
      %p190 = scmp.ne.s32.totalorder %s182, %s184
      %p191 = scmp.eq.s32.totalorder %s22, 3
      %p192 = por %p190, %p191
      %p193 = scmp.ne.s32.totalorder %s184, %s185
      %p194 = scmp.eq.s32.totalorder %s22, 0
      %p195 = por %p193, %p194
      %p196 = scmp.ne.s32.totalorder %s184, %s185
      %p197 = scmp.eq.s32.totalorder %s23, 3
      %p198 = por %p196, %p197
      %p200 = scmp.ne.s32.totalorder %s185, %s199
      %p201 = scmp.eq.s32.totalorder %s23, 0
      %p202 = por %p200, %p201
      %s203 = ssub.s32 %s17, %s24
      %p204 = scmp.eq.s32.totalorder %s203, 0
      %s206 = sadd.s32 %s205, 1
      %s207 = scalar_select %p204, %s205, %s206
      %p210 = pneg %p204
      %p211 = scmp.eq.s32.totalorder %s17, 3
      %p212 = por %p210, %p211
      %p213 = scmp.ne.s32.totalorder %s205, %s208
      %p214 = scmp.eq.s32.totalorder %s17, 0
      %p215 = por %p213, %p214
      %p216 = scmp.ne.s32.totalorder %s205, %s208
      %p217 = scmp.eq.s32.totalorder %s22, 3
      %p218 = por %p216, %p217
      %p219 = scmp.ne.s32.totalorder %s208, %s209
      %p220 = scmp.eq.s32.totalorder %s22, 0
      %p221 = por %p219, %p220
      %p222 = scmp.ne.s32.totalorder %s208, %s209
      %p223 = scmp.eq.s32.totalorder %s23, 3
      %p224 = por %p222, %p223
      %p226 = scmp.ne.s32.totalorder %s209, %s225
      %p227 = scmp.eq.s32.totalorder %s23, 0
      %p228 = por %p226, %p227
      %p229 = scmp.le.s32.totalorder 1, %s17
      %p230 = scmp.lt.s32.totalorder %s17, 5
      %p231 = pnand %p229, %p230
      %p232 = pneg %p231
      // Predicated region
      $region9: #{tpu_custom_call.1} parent=5 // pred_check
        _
      $region10: #{tpu_custom_call.1} parent=5 // pred_check_branch
        %234 = sbr.rel (%p231) target = $region12
      $region11: #{tpu_custom_call.1} parent=5 // pred_region
        %s235 = ssub.s32 %s17, 1
        // Predicated region
        $region13: #{tpu_custom_call.1} parent=11 // pred_check
          %p236 = pneg %p90
        $region14: #{tpu_custom_call.1} parent=11 // pred_check_branch
          %238 = sbr.rel (%p236) target = $region16
        $region15: #{tpu_custom_call.1} parent=11 // pred_region
          _
        $region16: #{tpu_custom_call.1} parent=11 // pred_fallthru
          _
        // Predicated region
        $region17: #{tpu_custom_call.1} parent=11 // pred_check
          %p239 = pneg %p111
        $region18: #{tpu_custom_call.1} parent=11 // pred_check_branch
          %241 = sbr.rel (%p239) target = $region20
        $region19: #{tpu_custom_call.1} parent=11 // pred_region
          _
        $region20: #{tpu_custom_call.1} parent=11 // pred_fallthru
          _
        // Predicated region
        $region21: #{tpu_custom_call.1} parent=11 // pred_check
          %p242 = pneg %p132
        $region22: #{tpu_custom_call.1} parent=11 // pred_check_branch
          %244 = sbr.rel (%p242) target = $region24
        $region23: #{tpu_custom_call.1} parent=11 // pred_region
          _
        $region24: #{tpu_custom_call.1} parent=11 // pred_fallthru
          _
        // Predicated region
        $region25: #{tpu_custom_call.1} parent=11 // pred_check
          %p245 = pneg %p153
        $region26: #{tpu_custom_call.1} parent=11 // pred_check_branch
          %247 = sbr.rel (%p245) target = $region28
        $region27: #{tpu_custom_call.1} parent=11 // pred_region
          _
        $region28: #{tpu_custom_call.1} parent=11 // pred_fallthru
          _
        // Predicated region
        $region29: #{tpu_custom_call.1} parent=11 // pred_check
          %p248 = pneg %p174
        $region30: #{tpu_custom_call.1} parent=11 // pred_check_branch
          %250 = sbr.rel (%p248) target = $region32
        $region31: #{tpu_custom_call.1} parent=11 // pred_region
          _
        $region32: #{tpu_custom_call.1} parent=11 // pred_fallthru
          _
        // Predicated region
        $region33: #{tpu_custom_call.1} parent=11 // pred_check
          %p251 = pneg %p195
        $region34: #{tpu_custom_call.1} parent=11 // pred_check_branch
          %253 = sbr.rel (%p251) target = $region36
        $region35: #{tpu_custom_call.1} parent=11 // pred_region
          _
        $region36: #{tpu_custom_call.1} parent=11 // pred_fallthru
          _
      $region12: #{tpu_custom_call.1} parent=5 // pred_fallthru
        _
      %p254 = scmp.lt.s32.totalorder %s17, 4
      // Predicated region
      $region37: #{tpu_custom_call.1} parent=5 // pred_check
        %p255 = pneg %p254
      $region38: #{tpu_custom_call.1} parent=5 // pred_check_branch
        %257 = sbr.rel (%p255) target = $region40
      $region39: #{tpu_custom_call.1} parent=5 // pred_region
        // Predicated region
        $region41: #{tpu_custom_call.1} parent=39 // pred_check
          %p258 = pneg %p37
        $region42: #{tpu_custom_call.1} parent=39 // pred_check_branch
          %260 = sbr.rel (%p258) target = $region44
        $region43: #{tpu_custom_call.1} parent=39 // pred_region
          %p261 = scmp.lt.s32.totalorder %s17, 3
          %s262 = scalar_select %p261, %s17, 3
          %s263 = smul.addr %s262, 2
          %s264 = smul.addr %s263, 8
          %s265 = scalar_lea.vmem %s0, %s264
        $region44: #{tpu_custom_call.1} parent=39 // pred_fallthru
          _
        // Predicated region
        $region45: #{tpu_custom_call.1} parent=39 // pred_check
          %p266 = pneg %p63
        $region46: #{tpu_custom_call.1} parent=39 // pred_check_branch
          %268 = sbr.rel (%p266) target = $region48
        $region47: #{tpu_custom_call.1} parent=39 // pred_region
          %p269 = scmp.lt.s32.totalorder %s17, 3
          %s270 = scalar_select %p269, %s17, 3
          %s271 = smul.addr %s270, 16
          %s272 = smul.addr %s271, 8
          %s273 = scalar_lea.vmem %s1, %s272
        $region48: #{tpu_custom_call.1} parent=39 // pred_fallthru
          _
      $region40: #{tpu_custom_call.1} parent=5 // pred_fallthru
        _
      %p274 = scmp.le.s32.totalorder 1, %s17
      %p275 = scmp.lt.s32.totalorder %s17, 5
      %p276 = pnand %p274, %p275
      %p277 = pneg %p276
      // Predicated region
      $region49: #{tpu_custom_call.1} parent=5 // pred_check
        _
      $region50: #{tpu_custom_call.1} parent=5 // pred_check_branch
        %279 = sbr.rel (%p276) target = $region52
      $region51: #{tpu_custom_call.1} parent=5 // pred_region
        %s280 = ssub.s32 %s17, 1
        %p281 = scmp.lt.s32.totalorder %s22, 3
        %s282 = scalar_select %p281, %s22, 3
        %s283 = smul.addr %s282, 2
        %s284 = smul.addr %s283, 8
        %s285 = scalar_lea.vmem %s0, %s284
        %p286 = pneg %p43
        %p287 = pneg %p40
        %p288 = scmp.lt.s32.totalorder %s22, 3
        %s289 = scalar_select %p288, %s22, 3
        %s290 = smul.addr %s289, 16
        %s291 = smul.addr %s290, 8
        %s292 = scalar_lea.vmem %s1, %s291
        %p293 = pneg %p69
        %p294 = pneg %p66
        %p295 = pneg %p90
        %p296 = pneg %p87
        %p297 = pneg %p111
        %p298 = pneg %p108
        %p299 = pneg %p132
        %p300 = pneg %p129
        %p301 = pneg %p153
        %p302 = pneg %p150
        %p303 = pneg %p174
        %p304 = pneg %p171
        %p305 = pneg %p195
        %p306 = pneg %p192
        %p307 = pneg %p221
        %p308 = pneg %p218
        %s309 = sand.u32 %s208, 1
        %s310 = scalar_lea.sflag [#allocation3], %s309
        %s311 = sand.u32 %s208, 1
        %s312 = smul.addr %s311, 16
        %s313 = scalar_lea.vmem [#allocation2], %s312
        %p314 = scmp.lt.s32.totalorder %s22, 3
        %s315 = scalar_select %p314, %s22, 3
        %s316 = smul.addr %s315, 2
        %s317 = smul.addr %s316, 8
        %s318 = scalar_lea.vmem %s0, %s317
        %p319 = scmp.lt.s32.totalorder %s22, 3
        %s320 = scalar_select %p319, %s22, 3
        %s321 = smul.addr %s320, 16
        %s322 = smul.addr %s321, 8
        %s323 = scalar_lea.vmem %s1, %s322
        %v325 = vld [vmem:[%s318] sm:$0xff]
        %v326 = vld [vmem:[%s318 + $0x8] sm:$0xff]
        %v327 = vpack.c.bf16 %v326, %v325
        %v328 = vld [vmem:[%s2] sm:$0xff]
        %v329 = vld [vmem:[%s2 + $0x8] sm:$0xff]
        %v330 = vld [vmem:[%s2 + $0x10] sm:$0xff]
        %v331 = vld [vmem:[%s2 + $0x18] sm:$0xff]
        %v332 = vld [vmem:[%s3] sm:$0x3]
        %v334 = vperm.slane %v332, 0
        %v335 = vperm.slane %v332, 1
        %v342 = vunpack.c.l.b16 %v328
        %v343 = vunpack.c.h.b16 %v328
        %v344 = vunpack.c.l.b16 %v329
        %v345 = vunpack.c.h.b16 %v329
        %v346 = vunpack.c.l.b16 %v330
        %v347 = vunpack.c.h.b16 %v330
        %v348 = vunpack.c.l.b16 %v331
        %v349 = vunpack.c.h.b16 %v331
        %v350 = vpack.c.b16 %v344, %v342
        %v351 = vpack.c.b16 %v345, %v343
        %v352 = vpack.c.b16 %v348, %v346
        %v353 = vpack.c.b16 %v349, %v347
        %vm358 = vcmask 261120
        %v360 = vsel %vm358, %v327, 0
        %362 = vmatpush.bf16.msra.mxu0 0
        %363 = vmatpush.bf16.msra.mxu0 0
        %364 = vmatpush.bf16.msra.mxu0 0
        %365 = vmatpush.bf16.msra.mxu0 0
        %366 = vmatpush.bf16.msra.mxu0 0
        %367 = vmatpush.bf16.msra.mxu0 0
        %368 = vmatpush.bf16.msra.mxu0 %v352
        %369 = vmatpush.bf16.msra.mxu0 %v350
        %370 = vmatmul.bf16.gmra.mxu0 %v360
        %v371 = vpop.f32.mrf.mxu0
        %v372 = vadd.f32 %v334, %v371
        %v373 = vpop.f32.mrf.mxu0
        %v374 = vadd.f32 %v334, %v373
        %375 = vdwg.mxu0
        %376 = vmatpush.bf16.msra.mxu0 0
        %377 = vmatpush.bf16.msra.mxu0 0
        %378 = vmatpush.bf16.msra.mxu0 0
        %379 = vmatpush.bf16.msra.mxu0 0
        %380 = vmatpush.bf16.msra.mxu0 0
        %381 = vmatpush.bf16.msra.mxu0 0
        %382 = vmatpush.bf16.msra.mxu0 %v353
        %383 = vmatpush.bf16.msra.mxu0 %v351
        %384 = vmatmul.bf16.gmra.mxu0 %v360
        %v385 = vpop.f32.mrf.mxu0
        %v386 = vadd.f32 %v335, %v385
        %v387 = vpop.f32.mrf.mxu0
        %v388 = vadd.f32 %v335, %v387
        %389 = vdwg.mxu0
        %v390 = vmax.f32 %v372, 0.0
        %v391 = vmax.f32 %v386, 0.0
        %v392 = vmax.f32 %v374, 0.0
        %v393 = vmax.f32 %v388, 0.0
        %v394 = vpack.c.bf16 %v392, %v390
        %v395 = vpack.c.bf16 %v393, %v391
        %v396 = vld [vmem:[%s4] sm:$0xf]
        %v397 = vld [vmem:[%s4 + $0x4] sm:$0xf]
        %v398 = vld [vmem:[%s4 + $0x8] sm:$0xf]
        %v399 = vld [vmem:[%s4 + $0xc] sm:$0xf]
        %v400 = vld [vmem:[%s4 + $0x10] sm:$0xf]
        %v401 = vld [vmem:[%s4 + $0x14] sm:$0xf]
        %v402 = vld [vmem:[%s4 + $0x18] sm:$0xf]
        %v403 = vld [vmem:[%s4 + $0x1c] sm:$0xf]
        %v404 = vld [vmem:[%s4 + $0x20] sm:$0xf]
        %v405 = vld [vmem:[%s4 + $0x24] sm:$0xf]
        %v406 = vld [vmem:[%s4 + $0x28] sm:$0xf]
        %v407 = vld [vmem:[%s4 + $0x2c] sm:$0xf]
        %v408 = vld [vmem:[%s4 + $0x30] sm:$0xf]
        %v409 = vld [vmem:[%s4 + $0x34] sm:$0xf]
        %v410 = vld [vmem:[%s4 + $0x38] sm:$0xf]
        %v411 = vld [vmem:[%s4 + $0x3c] sm:$0xf]
        %v412 = vld [vmem:[%s4 + $0x40] sm:$0xf]
        %v413 = vld [vmem:[%s4 + $0x44] sm:$0xf]
        %v414 = vld [vmem:[%s4 + $0x48] sm:$0xf]
        %v415 = vld [vmem:[%s4 + $0x4c] sm:$0xf]
        %v416 = vld [vmem:[%s4 + $0x50] sm:$0xf]
        %v417 = vld [vmem:[%s4 + $0x54] sm:$0xf]
        %v418 = vld [vmem:[%s4 + $0x58] sm:$0xf]
        %v419 = vld [vmem:[%s4 + $0x5c] sm:$0xf]
        %v420 = vld [vmem:[%s4 + $0x60] sm:$0xf]
        %v421 = vld [vmem:[%s4 + $0x64] sm:$0xf]
        %v422 = vld [vmem:[%s4 + $0x68] sm:$0xf]
        %v423 = vld [vmem:[%s4 + $0x6c] sm:$0xf]
        %v424 = vld [vmem:[%s4 + $0x70] sm:$0xf]
        %v425 = vld [vmem:[%s4 + $0x74] sm:$0xf]
        %v426 = vld [vmem:[%s4 + $0x78] sm:$0xf]
        %v427 = vld [vmem:[%s4 + $0x7c] sm:$0xf]
        %v428 = vld [vmem:[%s5] sm:$0x1]
        %v430 = vperm.slane %v428, 0
        %v464 = vunpack.c.l.b16 %v396
        %v465 = vunpack.c.l.b16 %v397
        %v466 = vunpack.c.l.b16 %v398
        %v467 = vunpack.c.l.b16 %v399
        %v468 = vunpack.c.l.b16 %v400
        %v469 = vunpack.c.l.b16 %v401
        %v470 = vunpack.c.l.b16 %v402
        %v471 = vunpack.c.l.b16 %v403
        %v472 = vunpack.c.l.b16 %v404
        %v473 = vunpack.c.l.b16 %v405
        %v474 = vunpack.c.l.b16 %v406
        %v475 = vunpack.c.l.b16 %v407
        %v476 = vunpack.c.l.b16 %v408
        %v477 = vunpack.c.l.b16 %v409
        %v478 = vunpack.c.l.b16 %v410
        %v479 = vunpack.c.l.b16 %v411
        %v480 = vunpack.c.l.b16 %v412
        %v481 = vunpack.c.l.b16 %v413
        %v482 = vunpack.c.l.b16 %v414
        %v483 = vunpack.c.l.b16 %v415
        %v484 = vunpack.c.l.b16 %v416
        %v485 = vunpack.c.l.b16 %v417
        %v486 = vunpack.c.l.b16 %v418
        %v487 = vunpack.c.l.b16 %v419
        %v488 = vunpack.c.l.b16 %v420
        %v489 = vunpack.c.l.b16 %v421
        %v490 = vunpack.c.l.b16 %v422
        %v491 = vunpack.c.l.b16 %v423
        %v492 = vunpack.c.l.b16 %v424
        %v493 = vunpack.c.l.b16 %v425
        %v494 = vunpack.c.l.b16 %v426
        %v495 = vunpack.c.l.b16 %v427
        %v496 = vpack.c.b16 %v465, %v464
        %v497 = vpack.c.b16 %v467, %v466
        %v498 = vpack.c.b16 %v469, %v468
        %v499 = vpack.c.b16 %v471, %v470
        %v500 = vpack.c.b16 %v473, %v472
        %v501 = vpack.c.b16 %v475, %v474
        %v502 = vpack.c.b16 %v477, %v476
        %v503 = vpack.c.b16 %v479, %v478
        %v504 = vpack.c.b16 %v481, %v480
        %v505 = vpack.c.b16 %v483, %v482
        %v506 = vpack.c.b16 %v485, %v484
        %v507 = vpack.c.b16 %v487, %v486
        %v508 = vpack.c.b16 %v489, %v488
        %v509 = vpack.c.b16 %v491, %v490
        %v510 = vpack.c.b16 %v493, %v492
        %v511 = vpack.c.b16 %v495, %v494
        %528 = vmatpush.bf16.msra.mxu0 %v503
        %529 = vmatpush.bf16.msra.mxu0 %v502
        %530 = vmatpush.bf16.msra.mxu0 %v501
        %531 = vmatpush.bf16.msra.mxu0 %v500
        %532 = vmatpush.bf16.msra.mxu0 %v499
        %533 = vmatpush.bf16.msra.mxu0 %v498
        %534 = vmatpush.bf16.msra.mxu0 %v497
        %535 = vmatpush.bf16.msra.mxu0 %v496
        %536 = vmatmul.bf16.gmra.mxu0 %v394
        %v537 = vpop.f32.mrf.mxu0
        %v538 = vadd.f32 %v430, %v537
        %v539 = vpop.f32.mrf.mxu0
        %v540 = vadd.f32 %v430, %v539
        %541 = vdwg.mxu0
        %542 = vmatpush.bf16.msra.mxu0 %v511
        %543 = vmatpush.bf16.msra.mxu0 %v510
        %544 = vmatpush.bf16.msra.mxu0 %v509
        %545 = vmatpush.bf16.msra.mxu0 %v508
        %546 = vmatpush.bf16.msra.mxu0 %v507
        %547 = vmatpush.bf16.msra.mxu0 %v506
        %548 = vmatpush.bf16.msra.mxu0 %v505
        %549 = vmatpush.bf16.msra.mxu0 %v504
        %550 = vmatmul.bf16.gmra.mxu0 %v395
        %v551 = vpop.f32.mrf.mxu0
        %v552 = vadd.f32 %v538, %v551
        %v553 = vpop.f32.mrf.mxu0
        %v554 = vadd.f32 %v540, %v553
        %555 = vdwg.mxu0
        %v556 = vmax.f32 %v552, 0.0
        %v557 = vmax.f32 %v554, 0.0
        %v558 = vpack.c.bf16 %v557, %v556
        %v559 = vld [vmem:[%s6] sm:$0xf]
        %v560 = vld [vmem:[%s6 + $0x4] sm:$0xf]
        %v561 = vld [vmem:[%s6 + $0x8] sm:$0xf]
        %v562 = vld [vmem:[%s6 + $0xc] sm:$0xf]
        %v563 = vld [vmem:[%s6 + $0x10] sm:$0xf]
        %v564 = vld [vmem:[%s6 + $0x14] sm:$0xf]
        %v565 = vld [vmem:[%s6 + $0x18] sm:$0xf]
        %v566 = vld [vmem:[%s6 + $0x1c] sm:$0xf]
        %v567 = vld [vmem:[%s6 + $0x20] sm:$0xf]
        %v568 = vld [vmem:[%s6 + $0x24] sm:$0xf]
        %v569 = vld [vmem:[%s6 + $0x28] sm:$0xf]
        %v570 = vld [vmem:[%s6 + $0x2c] sm:$0xf]
        %v571 = vld [vmem:[%s6 + $0x30] sm:$0xf]
        %v572 = vld [vmem:[%s6 + $0x34] sm:$0xf]
        %v573 = vld [vmem:[%s6 + $0x38] sm:$0xf]
        %v574 = vld [vmem:[%s6 + $0x3c] sm:$0xf]
        %v575 = vld [vmem:[%s7] sm:$0x1]
        %v577 = vperm.slane %v575, 0
        %v595 = vunpack.c.l.b16 %v559
        %v596 = vunpack.c.l.b16 %v560
        %v597 = vunpack.c.l.b16 %v561
        %v598 = vunpack.c.l.b16 %v562
        %v599 = vunpack.c.l.b16 %v563
        %v600 = vunpack.c.l.b16 %v564
        %v601 = vunpack.c.l.b16 %v565
        %v602 = vunpack.c.l.b16 %v566
        %v603 = vunpack.c.l.b16 %v567
        %v604 = vunpack.c.l.b16 %v568
        %v605 = vunpack.c.l.b16 %v569
        %v606 = vunpack.c.l.b16 %v570
        %v607 = vunpack.c.l.b16 %v571
        %v608 = vunpack.c.l.b16 %v572
        %v609 = vunpack.c.l.b16 %v573
        %v610 = vunpack.c.l.b16 %v574
        %v611 = vpack.c.b16 %v596, %v595
        %v612 = vpack.c.b16 %v598, %v597
        %v613 = vpack.c.b16 %v600, %v599
        %v614 = vpack.c.b16 %v602, %v601
        %v615 = vpack.c.b16 %v604, %v603
        %v616 = vpack.c.b16 %v606, %v605
        %v617 = vpack.c.b16 %v608, %v607
        %v618 = vpack.c.b16 %v610, %v609
        %627 = vmatpush.bf16.msra.mxu0 %v618
        %628 = vmatpush.bf16.msra.mxu0 %v617
        %629 = vmatpush.bf16.msra.mxu0 %v616
        %630 = vmatpush.bf16.msra.mxu0 %v615
        %631 = vmatpush.bf16.msra.mxu0 %v614
        %632 = vmatpush.bf16.msra.mxu0 %v613
        %633 = vmatpush.bf16.msra.mxu0 %v612
        %634 = vmatpush.bf16.msra.mxu0 %v611
        %635 = vmatmul.bf16.gmra.mxu0 %v558
        %v636 = vpop.f32.mrf.mxu0
        %v637 = vadd.f32 %v577, %v636
        %v638 = vpop.f32.mrf.mxu0
        %v639 = vadd.f32 %v577, %v638
        %640 = vdwg.mxu0
        %v641 = vld [vmem:[%s323] sm:$0xff]
        %v642 = vld [vmem:[%s323 + $0x8] sm:$0xff]
        %v643 = vld [vmem:[%s323 + $0x10] sm:$0xff]
        %v644 = vld [vmem:[%s323 + $0x18] sm:$0xff]
        %v645 = vld [vmem:[%s323 + $0x20] sm:$0xff]
        %v646 = vld [vmem:[%s323 + $0x28] sm:$0xff]
        %v647 = vld [vmem:[%s323 + $0x30] sm:$0xff]
        %v648 = vld [vmem:[%s323 + $0x38] sm:$0xff]
        %v649 = vld [vmem:[%s323 + $0x40] sm:$0xff]
        %v650 = vld [vmem:[%s323 + $0x48] sm:$0xff]
        %v651 = vld [vmem:[%s323 + $0x50] sm:$0xff]
        %v652 = vld [vmem:[%s323 + $0x58] sm:$0xff]
        %v653 = vld [vmem:[%s323 + $0x60] sm:$0xff]
        %v654 = vld [vmem:[%s323 + $0x68] sm:$0xff]
        %v655 = vld [vmem:[%s323 + $0x70] sm:$0xff]
        %v656 = vld [vmem:[%s323 + $0x78] sm:$0xff]
        %v657 = vpack.c.bf16 %v642, %v641
        %v658 = vpack.c.bf16 %v644, %v643
        %v659 = vpack.c.bf16 %v646, %v645
        %v660 = vpack.c.bf16 %v648, %v647
        %v661 = vpack.c.bf16 %v650, %v649
        %v662 = vpack.c.bf16 %v652, %v651
        %v663 = vpack.c.bf16 %v654, %v653
        %v664 = vpack.c.bf16 %v656, %v655
        %v666 = vsel %vm358, %v657, 0
        %v669 = vsel %vm358, %v658, 0
        %v672 = vsel %vm358, %v659, 0
        %v675 = vsel %vm358, %v660, 0
        %v678 = vsel %vm358, %v661, 0
        %v681 = vsel %vm358, %v662, 0
        %v684 = vsel %vm358, %v663, 0
        %v687 = vsel %vm358, %v664, 0
        %689 = vmatpush.bf16.msra.mxu0 0
        %690 = vmatpush.bf16.msra.mxu0 0
        %691 = vmatpush.bf16.msra.mxu0 0
        %692 = vmatpush.bf16.msra.mxu0 0
        %693 = vmatpush.bf16.msra.mxu0 0
        %694 = vmatpush.bf16.msra.mxu0 0
        %695 = vmatpush.bf16.msra.mxu0 %v352
        %696 = vmatpush.bf16.msra.mxu0 %v350
        %697 = vmatmul.bf16.gmra.mxu0 %v666
        %v698 = vpop.f32.mrf.mxu0
        %v699 = vadd.f32 %v334, %v698
        %v700 = vpop.f32.mrf.mxu0
        %v701 = vadd.f32 %v334, %v700
        %702 = vmatmul.bf16.gmra.mxu0 %v669
        %v703 = vpop.f32.mrf.mxu0
        %v704 = vadd.f32 %v334, %v703
        %v705 = vpop.f32.mrf.mxu0
        %v706 = vadd.f32 %v334, %v705
        %707 = vmatmul.bf16.gmra.mxu0 %v672
        %v708 = vpop.f32.mrf.mxu0
        %v709 = vadd.f32 %v334, %v708
        %v710 = vpop.f32.mrf.mxu0
        %v711 = vadd.f32 %v334, %v710
        %712 = vmatmul.bf16.gmra.mxu0 %v675
        %v713 = vpop.f32.mrf.mxu0
        %v714 = vadd.f32 %v334, %v713
        %v715 = vpop.f32.mrf.mxu0
        %v716 = vadd.f32 %v334, %v715
        %717 = vmatmul.bf16.gmra.mxu0 %v678
        %v718 = vpop.f32.mrf.mxu0
        %v719 = vadd.f32 %v334, %v718
        %v720 = vpop.f32.mrf.mxu0
        %v721 = vadd.f32 %v334, %v720
        %722 = vmatmul.bf16.gmra.mxu0 %v681
        %v723 = vpop.f32.mrf.mxu0
        %v724 = vadd.f32 %v334, %v723
        %v725 = vpop.f32.mrf.mxu0
        %v726 = vadd.f32 %v334, %v725
        %727 = vmatmul.bf16.gmra.mxu0 %v684
        %v728 = vpop.f32.mrf.mxu0
        %v729 = vadd.f32 %v334, %v728
        %v730 = vpop.f32.mrf.mxu0
        %v731 = vadd.f32 %v334, %v730
        %732 = vmatmul.bf16.gmra.mxu0 %v687
        %v733 = vpop.f32.mrf.mxu0
        %v734 = vadd.f32 %v334, %v733
        %v735 = vpop.f32.mrf.mxu0
        %v736 = vadd.f32 %v334, %v735
        %737 = vdwg.mxu0
        %738 = vmatpush.bf16.msra.mxu0 0
        %739 = vmatpush.bf16.msra.mxu0 0
        %740 = vmatpush.bf16.msra.mxu0 0
        %741 = vmatpush.bf16.msra.mxu0 0
        %742 = vmatpush.bf16.msra.mxu0 0
        %743 = vmatpush.bf16.msra.mxu0 0
        %744 = vmatpush.bf16.msra.mxu0 %v353
        %745 = vmatpush.bf16.msra.mxu0 %v351
        %746 = vmatmul.bf16.gmra.mxu0 %v666
        %v747 = vpop.f32.mrf.mxu0
        %v748 = vadd.f32 %v335, %v747
        %v749 = vpop.f32.mrf.mxu0
        %v750 = vadd.f32 %v335, %v749
        %751 = vmatmul.bf16.gmra.mxu0 %v669
        %v752 = vpop.f32.mrf.mxu0
        %v753 = vadd.f32 %v335, %v752
        %v754 = vpop.f32.mrf.mxu0
        %v755 = vadd.f32 %v335, %v754
        %756 = vmatmul.bf16.gmra.mxu0 %v672
        %v757 = vpop.f32.mrf.mxu0
        %v758 = vadd.f32 %v335, %v757
        %v759 = vpop.f32.mrf.mxu0
        %v760 = vadd.f32 %v335, %v759
        %761 = vmatmul.bf16.gmra.mxu0 %v675
        %v762 = vpop.f32.mrf.mxu0
        %v763 = vadd.f32 %v335, %v762
        %v764 = vpop.f32.mrf.mxu0
        %v765 = vadd.f32 %v335, %v764
        %766 = vmatmul.bf16.gmra.mxu0 %v678
        %v767 = vpop.f32.mrf.mxu0
        %v768 = vadd.f32 %v335, %v767
        %v769 = vpop.f32.mrf.mxu0
        %v770 = vadd.f32 %v335, %v769
        %771 = vmatmul.bf16.gmra.mxu0 %v681
        %v772 = vpop.f32.mrf.mxu0
        %v773 = vadd.f32 %v335, %v772
        %v774 = vpop.f32.mrf.mxu0
        %v775 = vadd.f32 %v335, %v774
        %776 = vmatmul.bf16.gmra.mxu0 %v684
        %v777 = vpop.f32.mrf.mxu0
        %v778 = vadd.f32 %v335, %v777
        %v779 = vpop.f32.mrf.mxu0
        %v780 = vadd.f32 %v335, %v779
        %781 = vmatmul.bf16.gmra.mxu0 %v687
        %v782 = vpop.f32.mrf.mxu0
        %v783 = vadd.f32 %v335, %v782
        %v784 = vpop.f32.mrf.mxu0
        %v785 = vadd.f32 %v335, %v784
        %786 = vdwg.mxu0
        %v787 = vmax.f32 %v699, 0.0
        %v788 = vmax.f32 %v748, 0.0
        %v789 = vmax.f32 %v701, 0.0
        %v790 = vmax.f32 %v750, 0.0
        %v791 = vmax.f32 %v704, 0.0
        %v792 = vmax.f32 %v753, 0.0
        %v793 = vmax.f32 %v706, 0.0
        %v794 = vmax.f32 %v755, 0.0
        %v795 = vmax.f32 %v709, 0.0
        %v796 = vmax.f32 %v758, 0.0
        %v797 = vmax.f32 %v711, 0.0
        %v798 = vmax.f32 %v760, 0.0
        %v799 = vmax.f32 %v714, 0.0
        %v800 = vmax.f32 %v763, 0.0
        %v801 = vmax.f32 %v716, 0.0
        %v802 = vmax.f32 %v765, 0.0
        %v803 = vmax.f32 %v719, 0.0
        %v804 = vmax.f32 %v768, 0.0
        %v805 = vmax.f32 %v721, 0.0
        %v806 = vmax.f32 %v770, 0.0
        %v807 = vmax.f32 %v724, 0.0
        %v808 = vmax.f32 %v773, 0.0
        %v809 = vmax.f32 %v726, 0.0
        %v810 = vmax.f32 %v775, 0.0
        %v811 = vmax.f32 %v729, 0.0
        %v812 = vmax.f32 %v778, 0.0
        %v813 = vmax.f32 %v731, 0.0
        %v814 = vmax.f32 %v780, 0.0
        %v815 = vmax.f32 %v734, 0.0
        %v816 = vmax.f32 %v783, 0.0
        %v817 = vmax.f32 %v736, 0.0
        %v818 = vmax.f32 %v785, 0.0
        %v819 = vpack.c.bf16 %v789, %v787
        %v820 = vpack.c.bf16 %v790, %v788
        %v821 = vpack.c.bf16 %v793, %v791
        %v822 = vpack.c.bf16 %v794, %v792
        %v823 = vpack.c.bf16 %v797, %v795
        %v824 = vpack.c.bf16 %v798, %v796
        %v825 = vpack.c.bf16 %v801, %v799
        %v826 = vpack.c.bf16 %v802, %v800
        %v827 = vpack.c.bf16 %v805, %v803
        %v828 = vpack.c.bf16 %v806, %v804
        %v829 = vpack.c.bf16 %v809, %v807
        %v830 = vpack.c.bf16 %v810, %v808
        %v831 = vpack.c.bf16 %v813, %v811
        %v832 = vpack.c.bf16 %v814, %v812
        %v833 = vpack.c.bf16 %v817, %v815
        %v834 = vpack.c.bf16 %v818, %v816
        %835 = vmatpush.bf16.msra.mxu0 %v503
        %836 = vmatpush.bf16.msra.mxu0 %v502
        %837 = vmatpush.bf16.msra.mxu0 %v501
        %838 = vmatpush.bf16.msra.mxu0 %v500
        %839 = vmatpush.bf16.msra.mxu0 %v499
        %840 = vmatpush.bf16.msra.mxu0 %v498
        %841 = vmatpush.bf16.msra.mxu0 %v497
        %842 = vmatpush.bf16.msra.mxu0 %v496
        %843 = vmatmul.bf16.gmra.mxu0 %v819
        %v844 = vpop.f32.mrf.mxu0
        %v845 = vadd.f32 %v430, %v844
        %v846 = vpop.f32.mrf.mxu0
        %v847 = vadd.f32 %v430, %v846
        %848 = vmatmul.bf16.gmra.mxu0 %v821
        %v849 = vpop.f32.mrf.mxu0
        %v850 = vadd.f32 %v430, %v849
        %v851 = vpop.f32.mrf.mxu0
        %v852 = vadd.f32 %v430, %v851
        %853 = vmatmul.bf16.gmra.mxu0 %v823
        %v854 = vpop.f32.mrf.mxu0
        %v855 = vadd.f32 %v430, %v854
        %v856 = vpop.f32.mrf.mxu0
        %v857 = vadd.f32 %v430, %v856
        %858 = vmatmul.bf16.gmra.mxu0 %v825
        %v859 = vpop.f32.mrf.mxu0
        %v860 = vadd.f32 %v430, %v859
        %v861 = vpop.f32.mrf.mxu0
        %v862 = vadd.f32 %v430, %v861
        %863 = vmatmul.bf16.gmra.mxu0 %v827
        %v864 = vpop.f32.mrf.mxu0
        %v865 = vadd.f32 %v430, %v864
        %v866 = vpop.f32.mrf.mxu0
        %v867 = vadd.f32 %v430, %v866
        %868 = vmatmul.bf16.gmra.mxu0 %v829
        %v869 = vpop.f32.mrf.mxu0
        %v870 = vadd.f32 %v430, %v869
        %v871 = vpop.f32.mrf.mxu0
        %v872 = vadd.f32 %v430, %v871
        %873 = vmatmul.bf16.gmra.mxu0 %v831
        %v874 = vpop.f32.mrf.mxu0
        %v875 = vadd.f32 %v430, %v874
        %v876 = vpop.f32.mrf.mxu0
        %v877 = vadd.f32 %v430, %v876
        %878 = vmatmul.bf16.gmra.mxu0 %v833
        %v879 = vpop.f32.mrf.mxu0
        %v880 = vadd.f32 %v430, %v879
        %v881 = vpop.f32.mrf.mxu0
        %v882 = vadd.f32 %v430, %v881
        %883 = vdwg.mxu0
        %884 = vmatpush.bf16.msra.mxu0 %v511
        %885 = vmatpush.bf16.msra.mxu0 %v510
        %886 = vmatpush.bf16.msra.mxu0 %v509
        %887 = vmatpush.bf16.msra.mxu0 %v508
        %888 = vmatpush.bf16.msra.mxu0 %v507
        %889 = vmatpush.bf16.msra.mxu0 %v506
        %890 = vmatpush.bf16.msra.mxu0 %v505
        %891 = vmatpush.bf16.msra.mxu0 %v504
        %892 = vmatmul.bf16.gmra.mxu0 %v820
        %v893 = vpop.f32.mrf.mxu0
        %v894 = vadd.f32 %v845, %v893
        %v895 = vpop.f32.mrf.mxu0
        %v896 = vadd.f32 %v847, %v895
        %897 = vmatmul.bf16.gmra.mxu0 %v822
        %v898 = vpop.f32.mrf.mxu0
        %v899 = vadd.f32 %v850, %v898
        %v900 = vpop.f32.mrf.mxu0
        %v901 = vadd.f32 %v852, %v900
        %902 = vmatmul.bf16.gmra.mxu0 %v824
        %v903 = vpop.f32.mrf.mxu0
        %v904 = vadd.f32 %v855, %v903
        %v905 = vpop.f32.mrf.mxu0
        %v906 = vadd.f32 %v857, %v905
        %907 = vmatmul.bf16.gmra.mxu0 %v826
        %v908 = vpop.f32.mrf.mxu0
        %v909 = vadd.f32 %v860, %v908
        %v910 = vpop.f32.mrf.mxu0
        %v911 = vadd.f32 %v862, %v910
        %912 = vmatmul.bf16.gmra.mxu0 %v828
        %v913 = vpop.f32.mrf.mxu0
        %v914 = vadd.f32 %v865, %v913
        %v915 = vpop.f32.mrf.mxu0
        %v916 = vadd.f32 %v867, %v915
        %917 = vmatmul.bf16.gmra.mxu0 %v830
        %v918 = vpop.f32.mrf.mxu0
        %v919 = vadd.f32 %v870, %v918
        %v920 = vpop.f32.mrf.mxu0
        %v921 = vadd.f32 %v872, %v920
        %922 = vmatmul.bf16.gmra.mxu0 %v832
        %v923 = vpop.f32.mrf.mxu0
        %v924 = vadd.f32 %v875, %v923
        %v925 = vpop.f32.mrf.mxu0
        %v926 = vadd.f32 %v877, %v925
        %927 = vmatmul.bf16.gmra.mxu0 %v834
        %v928 = vpop.f32.mrf.mxu0
        %v929 = vadd.f32 %v880, %v928
        %v930 = vpop.f32.mrf.mxu0
        %v931 = vadd.f32 %v882, %v930
        %932 = vdwg.mxu0
        %v933 = vmax.f32 %v894, 0.0
        %v934 = vmax.f32 %v896, 0.0
        %v935 = vmax.f32 %v899, 0.0
        %v936 = vmax.f32 %v901, 0.0
        %v937 = vmax.f32 %v904, 0.0
        %v938 = vmax.f32 %v906, 0.0
        %v939 = vmax.f32 %v909, 0.0
        %v940 = vmax.f32 %v911, 0.0
        %v941 = vmax.f32 %v914, 0.0
        %v942 = vmax.f32 %v916, 0.0
        %v943 = vmax.f32 %v919, 0.0
        %v944 = vmax.f32 %v921, 0.0
        %v945 = vmax.f32 %v924, 0.0
        %v946 = vmax.f32 %v926, 0.0
        %v947 = vmax.f32 %v929, 0.0
        %v948 = vmax.f32 %v931, 0.0
        %v949 = vpack.c.bf16 %v934, %v933
        %v950 = vpack.c.bf16 %v936, %v935
        %v951 = vpack.c.bf16 %v938, %v937
        %v952 = vpack.c.bf16 %v940, %v939
        %v953 = vpack.c.bf16 %v942, %v941
        %v954 = vpack.c.bf16 %v944, %v943
        %v955 = vpack.c.bf16 %v946, %v945
        %v956 = vpack.c.bf16 %v948, %v947
        %957 = vmatpush.bf16.msra.mxu0 %v618
        %958 = vmatpush.bf16.msra.mxu0 %v617
        %959 = vmatpush.bf16.msra.mxu0 %v616
        %960 = vmatpush.bf16.msra.mxu0 %v615
        %961 = vmatpush.bf16.msra.mxu0 %v614
        %962 = vmatpush.bf16.msra.mxu0 %v613
        %963 = vmatpush.bf16.msra.mxu0 %v612
        %964 = vmatpush.bf16.msra.mxu0 %v611
        %965 = vmatmul.bf16.gmra.mxu0 %v949
        %v966 = vpop.f32.mrf.mxu0
        %v967 = vadd.f32 %v577, %v966
        %v968 = vpop.f32.mrf.mxu0
        %v969 = vadd.f32 %v577, %v968
        %970 = vmatmul.bf16.gmra.mxu0 %v950
        %v971 = vpop.f32.mrf.mxu0
        %v972 = vadd.f32 %v577, %v971
        %v973 = vpop.f32.mrf.mxu0
        %v974 = vadd.f32 %v577, %v973
        %975 = vmatmul.bf16.gmra.mxu0 %v951
        %v976 = vpop.f32.mrf.mxu0
        %v977 = vadd.f32 %v577, %v976
        %v978 = vpop.f32.mrf.mxu0
        %v979 = vadd.f32 %v577, %v978
        %980 = vmatmul.bf16.gmra.mxu0 %v952
        %v981 = vpop.f32.mrf.mxu0
        %v982 = vadd.f32 %v577, %v981
        %v983 = vpop.f32.mrf.mxu0
        %v984 = vadd.f32 %v577, %v983
        %985 = vmatmul.bf16.gmra.mxu0 %v953
        %v986 = vpop.f32.mrf.mxu0
        %v987 = vadd.f32 %v577, %v986
        %v988 = vpop.f32.mrf.mxu0
        %v989 = vadd.f32 %v577, %v988
        %990 = vmatmul.bf16.gmra.mxu0 %v954
        %v991 = vpop.f32.mrf.mxu0
        %v992 = vadd.f32 %v577, %v991
        %v993 = vpop.f32.mrf.mxu0
        %v994 = vadd.f32 %v577, %v993
        %995 = vmatmul.bf16.gmra.mxu0 %v955
        %v996 = vpop.f32.mrf.mxu0
        %v997 = vadd.f32 %v577, %v996
        %v998 = vpop.f32.mrf.mxu0
        %v999 = vadd.f32 %v577, %v998
        %1000 = vmatmul.bf16.gmra.mxu0 %v956
        %v1001 = vpop.f32.mrf.mxu0
        %v1002 = vadd.f32 %v577, %v1001
        %v1003 = vpop.f32.mrf.mxu0
        %v1004 = vadd.f32 %v577, %v1003
        %1005 = vdwg.mxu0
        %1006 = vmatpush.xpose.msra.mxu0 %v1004
        %1007 = vmatpush.xpose.msra.mxu0 %v1002
        %1008 = vmatpush.xpose.msra.mxu0 %v999
        %1009 = vmatpush.xpose.msra.mxu0 %v997
        %1010 = vmatpush.xpose.msra.mxu0 %v994
        %1011 = vmatpush.xpose.msra.mxu0 %v992
        %1012 = vmatpush.xpose.msra.mxu0 %v989
        %1013 = vmatpush.xpose.msra.mxu0 %v987
        %1014 = vmatpush.xpose.msra.mxu0 %v984
        %1015 = vmatpush.xpose.msra.mxu0 %v982
        %1016 = vmatpush.xpose.msra.mxu0 %v979
        %1017 = vmatpush.xpose.msra.mxu0 %v977
        %1018 = vmatpush.xpose.msra.mxu0 %v974
        %1019 = vmatpush.xpose.msra.mxu0 %v972
        %1020 = vmatpush.xpose.msra.mxu0 %v969
        %1021 = vmatpush.xpose.msra.mxu0 %v967
        %1022 = vmatmul.f32.gmra.mxu0 %v637
        %v1023 = vpop.f32.mrf.mxu0
        %v1024 = vadd.f32 0.0, %v1023
        %1025 = vmatmul.f32.gmra.mxu0 %v639
        %v1026 = vpop.f32.mrf.mxu0
        %v1027 = vadd.f32 0.0, %v1026
        %1028 = vdwg.mxu0
        %v1029 = vmul.f32 %v637, %v637
        %v1030 = vmul.f32 %v639, %v639
        %1031 = vadd.xlane.f32.xlu0 %v1029
        %v1032 = vpop.xlane.xlu0 %1031
        %1033 = vadd.xlane.f32.xlu0 %v1030
        %v1034 = vpop.xlane.xlu0 %1033
        %v1035 = vmul.f32 %v967, %v967
        %v1036 = vmul.f32 %v969, %v969
        %v1037 = vmul.f32 %v972, %v972
        %v1038 = vmul.f32 %v974, %v974
        %v1039 = vmul.f32 %v977, %v977
        %v1040 = vmul.f32 %v979, %v979
        %v1041 = vmul.f32 %v982, %v982
        %v1042 = vmul.f32 %v984, %v984
        %v1043 = vmul.f32 %v987, %v987
        %v1044 = vmul.f32 %v989, %v989
        %v1045 = vmul.f32 %v992, %v992
        %v1046 = vmul.f32 %v994, %v994
        %v1047 = vmul.f32 %v997, %v997
        %v1048 = vmul.f32 %v999, %v999
        %v1049 = vmul.f32 %v1002, %v1002
        %v1050 = vmul.f32 %v1004, %v1004
        %1051 = vmatpush.xpose.msra.mxu0 %v1050
        %1052 = vmatpush.xpose.msra.mxu0 %v1049
        %1053 = vmatpush.xpose.msra.mxu0 %v1048
        %1054 = vmatpush.xpose.msra.mxu0 %v1047
        %1055 = vmatpush.xpose.msra.mxu0 %v1046
        %1056 = vmatpush.xpose.msra.mxu0 %v1045
        %1057 = vmatpush.xpose.msra.mxu0 %v1044
        %1058 = vmatpush.xpose.msra.mxu0 %v1043
        %1059 = vmatpush.xpose.msra.mxu0 %v1042
        %1060 = vmatpush.xpose.msra.mxu0 %v1041
        %1061 = vmatpush.xpose.msra.mxu0 %v1040
        %1062 = vmatpush.xpose.msra.mxu0 %v1039
        %1063 = vmatpush.xpose.msra.mxu0 %v1038
        %1064 = vmatpush.xpose.msra.mxu0 %v1037
        %1065 = vmatpush.xpose.msra.mxu0 %v1036
        %1066 = vmatpush.xpose.msra.mxu0 %v1035
        %1067 = vmatmul.f32.gmra.mxu0 1.0
        %v1068 = vpop.f32.mrf.mxu0
        %v1069 = vadd.f32 0.0, %v1068
        %1070 = vdwg.mxu0
        %v1071 = vperm.slane %v1069, 0
        %v1072 = vmul.f32 %v1032, %v1071
        %v1073 = vmul.f32 %v1034, %v1071
        %v1074 = vmax.f32 %v1072, 1e-16
        %v1075 = vmax.f32 %v1073, 1e-16
        %v1076 = vrsqrt.pop %v1074
        %v1077 = vmul.f32 %v1076, %v1074
        %v1078 = vmul.f32 %v1077, %v1076
        %v1079 = vmul.f32 0.5, %v1078
        %v1080 = vsub.f32 1.5, %v1079
        %v1081 = vmul.f32 %v1076, %v1080
        %vm1082 = vweird.f32 %v1074
        %vm1083 = vweird.f32 %v1076
        %vm1084 = vmor %vm1082, %vm1083
        %v1085 = vsel %vm1084, %v1076, %v1081
        %v1086 = vrsqrt.pop %v1075
        %v1087 = vmul.f32 %v1086, %v1075
        %v1088 = vmul.f32 %v1087, %v1086
        %v1089 = vmul.f32 0.5, %v1088
        %v1090 = vsub.f32 1.5, %v1089
        %v1091 = vmul.f32 %v1086, %v1090
        %vm1092 = vweird.f32 %v1075
        %vm1093 = vweird.f32 %v1086
        %vm1094 = vmor %vm1092, %vm1093
        %v1095 = vsel %vm1094, %v1086, %v1091
        %v1096 = vmul.f32 %v1024, 5.0
        %v1097 = vmul.f32 %v1027, 5.0
        %v1098 = vmul.f32 %v1096, %v1085
        %v1099 = vmul.f32 %v1097, %v1095
        %v1100 = vxor.u32 %v1098, 2147483648
        %v1101 = vxor.u32 %v1099, 2147483648
        %v1102 = vmul.f32 %v1100, 1.442695
        %v1103 = vpow.pop %v1102
        %v1104 = vmul.f32 %v1101, 1.442695
        %v1105 = vpow.pop %v1104
        %v1106 = vadd.f32 %v1103, 1.0
        %v1107 = vadd.f32 %v1105, 1.0
        %v1108 = vrcp.pop %v1106
        %v1109 = vmul.f32 %v1106, %v1108
        %v1110 = vsub.f32 1.0, %v1109
        %v1111 = vmul.f32 %v1108, %v1110
        %v1112 = vadd.f32 %v1108, %v1111
        %vm1113 = vweird.f32 %v1106
        %vm1114 = vweird.f32 %v1108
        %vm1115 = vmor %vm1113, %vm1114
        %v1116 = vsel %vm1115, %v1108, %v1112
        %v1117 = vand.u32 2147483647, %v1106
        %vm1118 = vcmp.eq.f32.partialorder %v1117, 8.507059e+37
        %v1119 = vand.u32 %v1106, 2147483648
        %v1120 = vor.u32 1.1754944e-38, %v1119
        %v1121 = vsel %vm1118, %v1120, %v1116
        %v1122 = vmul.f32 1.0, %v1121
        %v1123 = vrcp.pop %v1107
        %v1124 = vmul.f32 %v1107, %v1123
        %v1125 = vsub.f32 1.0, %v1124
        %v1126 = vmul.f32 %v1123, %v1125
        %v1127 = vadd.f32 %v1123, %v1126
        %vm1128 = vweird.f32 %v1107
        %vm1129 = vweird.f32 %v1123
        %vm1130 = vmor %vm1128, %vm1129
        %v1131 = vsel %vm1130, %v1123, %v1127
        %v1132 = vand.u32 2147483647, %v1107
        %vm1133 = vcmp.eq.f32.partialorder %v1132, 8.507059e+37
        %v1134 = vand.u32 %v1107, 2147483648
        %v1135 = vor.u32 1.1754944e-38, %v1134
        %v1136 = vsel %vm1133, %v1135, %v1131
        %v1137 = vmul.f32 1.0, %v1136
        %1138 = vst [vmem:[%s313] sm:$0xff] %v1122
        %1139 = vst [vmem:[%s313 + $0x8] sm:$0xff] %v1137
        %s1140 = sand.u32 %s208, 1
        %s1141 = scalar_lea.sflag [#allocation3], %s1140
        %s1142 = sand.u32 %s208, 1
        %s1143 = smul.addr %s1142, 16
        %s1144 = scalar_lea.vmem [#allocation2], %s1143
        // Predicated region
        $region53: #{tpu_custom_call.1} parent=51 // pred_check
          %p1145 = pneg %p218
        $region54: #{tpu_custom_call.1} parent=51 // pred_check_branch
          %1147 = sbr.rel (%p1145) target = $region56
        $region55: #{tpu_custom_call.1} parent=51 // pred_region
          %1149 = vsyncadd %s1141, 0
          %s1150 = smul.addr %s22, 2
          %s1151 = smul.addr %s1150, 8
          %s1152 = scalar_lea.hbm %s8, %s1151
          %s1153 = sshll.u32 %s1144, 4
          %s1154 = int_to_ptr.vmem [resolvable:$true] %s1153
          %s1155 = sshll.u32 %s1152, 4
          %s1156 = int_to_ptr.hbm [resolvable:$true] %s1155
          %1161 = dma.vmem_to_hbm [thread:$0]  %s1154, 256, %s1156, %s1141, 128, 128, 8
        $region56: #{tpu_custom_call.1} parent=51 // pred_fallthru
          _
      $region52: #{tpu_custom_call.1} parent=5 // pred_fallthru
        _
      %p1162 = scmp.le.s32.totalorder 2, %s17
      // Predicated region
      $region57: #{tpu_custom_call.1} parent=5 // pred_check
        %p1163 = pneg %p1162
      $region58: #{tpu_custom_call.1} parent=5 // pred_check_branch
        %1165 = sbr.rel (%p1163) target = $region60
      $region59: #{tpu_custom_call.1} parent=5 // pred_region
        %s1166 = ssub.s32 %s17, 2
        // Predicated region
        $region61: #{tpu_custom_call.1} parent=59 // pred_check
          %p1167 = pneg %p224
        $region62: #{tpu_custom_call.1} parent=59 // pred_check_branch
          %1169 = sbr.rel (%p1167) target = $region64
        $region63: #{tpu_custom_call.1} parent=59 // pred_region
          %s1170 = sand.u32 %s209, 1
          %s1171 = scalar_lea.sflag [#allocation3], %s1170
          %s1172 = sand.u32 %s209, 1
          %s1173 = smul.addr %s1172, 16
          %s1174 = scalar_lea.vmem [#allocation2], %s1173
          %1176 = dma.done %s1171, 256
        $region64: #{tpu_custom_call.1} parent=59 // pred_fallthru
          _
      $region60: #{tpu_custom_call.1} parent=5 // pred_fallthru
        _
    $region6: #{tpu_custom_call.1} parent=1 // loop_footer
      %s21 = sadd.s32 1, %s17
    $region7: #{tpu_custom_call.1} parent=1 // loop_footer_branch
      %16 = sbr.rel target = $region3
    $region8: #{tpu_custom_call.1} parent=1 // loop_exit
      _
    %1177 = vsyncpa [#allocation3], 1
    %s1178 = scalar_lea.sflag [#allocation3], 1
    %1179 = vsyncpa %s1178, 1

</llo_original>
